<compile_context>
chip_gen: v7x
topology: tpu7x:2x2x1
jax: 0.10.0
libtpu: 0.0.40
codegen_flags: <defaults>
</compile_context>

<pallas_src>
import functools

import jax
import jax.numpy as jnp
from jax.experimental import pallas as pl
from jax.experimental.pallas import tpu as pltpu


def _linear_ab_kernel(xu_ref, wt_ref, o_ref):
    # Single fused MXU matmul in VMEM: [x | u] @ [A | B].T
    # (weights arrive pre-transposed, so no transpose in the hot path).
    o_ref[...] = jnp.dot(
        xu_ref[...], wt_ref[...], preferred_element_type=jnp.float32
    ).astype(o_ref.dtype)


@functools.partial(jax.jit, static_argnames=("block_batch",))
def linear_ab(x, u, A, B, *, block_batch=512):
    """dx/dt = x @ A.T + u @ B.T  (matches PyTorch LinearAB.forward)."""
    batch, n_state = x.shape
    _, n_input = u.shape
    assert A.shape == (n_state, n_state)
    assert B.shape == (n_state, n_input)
    k = n_state + n_input

    # Weight prep outside the kernel (one-time XLA ops, not in the hot path):
    # fuse A and B and pre-transpose -> (K, n_state).
    w_t = jnp.concatenate([A, B], axis=1).T

    # Concatenate activations along the last (lane) axis -> (batch, K), so the
    # kernel issues exactly one MXU pass instead of two half-empty ones + add.
    xu = jnp.concatenate([x, u], axis=1)

    # Tile only the batch dim; W_t's index_map is constant so the weight block
    # stays resident in VMEM across all grid steps.
    tile_b = batch if batch <= block_batch else block_batch
    grid = (pl.cdiv(batch, tile_b),)

    flops = 2 * batch * k * n_state
    bytes_accessed = 4 * (batch * k + k * n_state + batch * n_state)

    return pl.pallas_call(
        _linear_ab_kernel,
        out_shape=jax.ShapeDtypeStruct((batch, n_state), x.dtype),
        grid_spec=pltpu.PrefetchScalarGridSpec(
            num_scalar_prefetch=0,
            grid=grid,
            in_specs=[
                pl.BlockSpec((tile_b, k), lambda i: (i, 0)),      # [x | u]
                pl.BlockSpec((k, n_state), lambda i: (0, 0)),     # [A | B].T (resident)
            ],
            out_specs=pl.BlockSpec((tile_b, n_state), lambda i: (i, 0)),
        ),
        compiler_params=pltpu.CompilerParams(
            dimension_semantics=("parallel",),
        ),
        cost_estimate=pl.CostEstimate(
            flops=flops, transcendentals=0, bytes_accessed=bytes_accessed
        ),
    )(xu, w_t)


if __name__ == "__main__":
    key = jax.random.PRNGKey(0)
    k_x, k_u, k_a, k_b = jax.random.split(key, 4)

    batch, n_state, n_input = 8, 32, 16

    x = jax.random.normal(k_x, (batch, n_state), dtype=jnp.float32)
    u = jax.random.normal(k_u, (batch, n_input), dtype=jnp.float32)
    # Deterministic synthetic "buffers" A and B (per module __init__ shapes).
    A = jax.random.normal(k_a, (n_state, n_state), dtype=jnp.float32) * 0.1
    B = jax.random.normal(k_b, (n_state, n_input), dtype=jnp.float32) * 0.1

    out = jax.block_until_ready(linear_ab(x, u, A, B))

    # Reference check in plain JAX.
    ref = x @ A.T + u @ B.T
    assert out.shape == (batch, n_state)
    assert jnp.allclose(out, ref, atol=1e-5, rtol=1e-5)

    print("KERNEL_OK")
</pallas_src>

<mosaic_0001>
module attributes {stable_mosaic.version = 11 : i64} {
  func.func @_linear_ab_kernel(%arg0: i32, %arg1: memref<8x48xf32, #tpu.memory_space<vmem>>, %arg2: memref<48x32xf32, #tpu.memory_space<vmem>>, %arg3: memref<8x32xf32, #tpu.memory_space<vmem>>) attributes {dimension_semantics = [#tpu.dimension_semantics<parallel>], iteration_bounds = array<i64: 1>, scalar_prefetch = 0 : i64, scratch_operands = 0 : i64, tpu.core_type = #tpu.core_type<tc>, window_params = [{transform_indices = @transform_0, window_bounds = array<i64: 8, 48>}, {pipeline_mode = #tpu.pipeline_mode<synchronous>, transform_indices = @transform_1, window_bounds = array<i64: 48, 32>}, {transform_indices = @transform_2, window_bounds = array<i64: 8, 32>}]} {
    %c0 = arith.constant 0 : index
    %c0_0 = arith.constant 0 : index
    %0 = vector.load %arg1[%c0, %c0_0] : memref<8x48xf32, #tpu.memory_space<vmem>>, vector<8x48xf32>
    %c0_1 = arith.constant 0 : index
    %c0_2 = arith.constant 0 : index
    %1 = vector.load %arg2[%c0_1, %c0_2] : memref<48x32xf32, #tpu.memory_space<vmem>>, vector<48x32xf32>
    %cst = arith.constant dense<0.000000e+00> : vector<8x32xf32>
    %2 = tpu.matmul %0, %1, %cst {dimension_numbers = #tpu.dot_dimension_numbers<[1], [0], [0], [1], [0, 0, 1, 1], [], []>} : vector<8x48xf32>, vector<48x32xf32>, vector<8x32xf32> -> vector<8x32xf32>
    %c0_3 = arith.constant 0 : index
    %c0_4 = arith.constant 0 : index
    %3 = vector.load %arg3[%c0_3, %c0_4] : memref<8x32xf32, #tpu.memory_space<vmem>>, vector<8x32xf32>
    tpu.vector_store %arg3[%c0_3, %c0_4], %2 {strides = array<i32>} : memref<8x32xf32, #tpu.memory_space<vmem>>, vector<8x32xf32>,
    return
  }
  func.func @transform_0(%arg0: i32) -> (i32, i32) {
    %c0_i32 = arith.constant 0 : i32
    %c0_i32_0 = arith.constant 0 : i32
    return %arg0, %c0_i32 : i32, i32
  }
  func.func @transform_1(%arg0: i32) -> (i32, i32) {
    %c0_i32 = arith.constant 0 : i32
    %c0_i32_0 = arith.constant 0 : i32
    %c0_i32_1 = arith.constant 0 : i32
    return %c0_i32, %c0_i32_0 : i32, i32
  }
  func.func @transform_2(%arg0: i32) -> (i32, i32) {
    %c0_i32 = arith.constant 0 : i32
    %c0_i32_0 = arith.constant 0 : i32
    return %arg0, %c0_i32 : i32, i32
  }
}

</mosaic_0001>

<llo_original>
// kernel: linear_ab.1
$region0: #{linear_ab.1}
  #allocation0 [shape = 'u32[]', space=smem, size = 0x4, offset = 0x4, fixed_abs, tag = 'smem constant byte address 0x4 - core index']
  #allocation1 [shape = 'u32[144,128]{1,0:T(1,128)}', space=vmem, size = 0x12000, scoped, tag = 'internal scratch']
  %s0 = inlined_call_operand.vmem [shape: f32[8,48], index: 0, kind: input, shape index: {}]
  %s1 = inlined_call_operand.vmem [shape: f32[48,32], index: 1, kind: input, shape index: {}]
  %s2 = inlined_call_operand.hbm [shape: f32[8,32], index: 2, kind: output, shape index: {}]
  %s3 = sld [smem:[#allocation0]]
  $region18: #{linear_ab.1} parent=0
    _
  %s5 = ssub.s32 1, %s3
  %s6 = scalar_select 0, %s5, %s3
  $region1: #{linear_ab.1} parent=0
    #allocation2 [shape = 'u8[4096]{0}', space=vmem, size = 0x1000, scoped, tag = 'output window, operand 0, single buffered']
    #allocation3 [shape = 's32[1]{0}', space=sflag, size = 0x4, scoped, tag = 'scoped memory for linear_ab.1']
    %7 = vsyncpa [#allocation3], 0
    // Predicated region
    $region2: #{linear_ab.1} parent=1 // pred_check
      _
    $region3: #{linear_ab.1} parent=1 // pred_check_branch
      %9 = sbr.rel (0) target = $region5
    $region4: #{linear_ab.1} parent=1 // pred_region
      _
    $region5: #{linear_ab.1} parent=1 // pred_fallthru
      _
    // Predicated region
    $region6: #{linear_ab.1} parent=1 // pred_check
      _
    $region7: #{linear_ab.1} parent=1 // pred_check_branch
      %11 = sbr.rel (0) target = $region9
    $region8: #{linear_ab.1} parent=1 // pred_region
      _
    $region9: #{linear_ab.1} parent=1 // pred_fallthru
      _
    %v12 = vld [vmem:[%s0] sm:$0xff]
    %v13 = vld [vmem:[%s1] sm:$0xff]
    %v14 = vld [vmem:[%s1 + $0x8] sm:$0xff]
    %v15 = vld [vmem:[%s1 + $0x10] sm:$0xff]
    %v16 = vld [vmem:[%s1 + $0x18] sm:$0xff]
    %v17 = vld [vmem:[%s1 + $0x20] sm:$0xff]
    %v18 = vld [vmem:[%s1 + $0x28] sm:$0xff]
    %vm19 = vcmask 392192
    %v21 = vsel %vm19, %v12, 0
    %23 = vmatprep.subr.mxu0 0.0
    %24 = vmatpush1.msra.mxu0 %v13
    %25 = vmatprep.subr.mxu0 0.0
    %26 = vmatpush1.msra.mxu0 %v14
    %27 = vmatprep.subr.mxu0 0.0
    %28 = vmatpush1.msra.mxu0 %v15
    %29 = vmatprep.subr.mxu0 0.0
    %30 = vmatpush1.msra.mxu0 %v16
    %31 = vmatprep.subr.mxu0 0.0
    %32 = vmatpush1.msra.mxu0 %v17
    %33 = vmatprep.subr.mxu0 0.0
    %34 = vmatpush1.msra.mxu0 %v18
    %35 = vmatprep.subr.mxu0 0.0
    %36 = vmatpush1.msra.mxu0 0.0
    %37 = vmatprep.subr.mxu0 0.0
    %38 = vmatpush1.msra.mxu0 0.0
    %39 = vmatprep.subr.mxu0 0.0
    %40 = vmatpush1.msra.mxu0 0.0
    %41 = vmatprep.subr.mxu0 0.0
    %42 = vmatpush1.msra.mxu0 0.0
    %43 = vmatprep.subr.mxu0 0.0
    %44 = vmatpush1.msra.mxu0 0.0
    %45 = vmatprep.subr.mxu0 0.0
    %46 = vmatpush1.msra.mxu0 0.0
    %47 = vmatprep.subr.mxu0 0.0
    %48 = vmatpush1.msra.mxu0 0.0
    %49 = vmatprep.subr.mxu0 0.0
    %50 = vmatpush1.msra.mxu0 0.0
    %51 = vmatprep.subr.mxu0 0.0
    %52 = vmatpush1.msra.mxu0 0.0
    %53 = vmatprep.subr.mxu0 0.0
    %54 = vmatpush1.msra.mxu0 0.0
    %55 = vmatprep.subr.mxu0 0.0
    %56 = vmatpush1.msra.mxu0 0.0
    %57 = vmatprep.subr.mxu0 0.0
    %58 = vmatpush1.msra.mxu0 0.0
    %59 = vmatprep.subr.mxu0 0.0
    %60 = vmatpush1.msra.mxu0 0.0
    %61 = vmatprep.subr.mxu0 0.0
    %62 = vmatpush1.msra.mxu0 0.0
    %63 = vmatprep.subr.mxu0 0.0
    %64 = vmatpush1.msra.mxu0 0.0
    %65 = vmatprep.subr.mxu0 0.0
    %66 = vmatpush1.msra.mxu0 0.0
    %67 = vmatprep.subr.mxu0 0.0
    %68 = vmatpush1.msra.mxu0 0.0
    %69 = vmatprep.subr.mxu0 0.0
    %70 = vmatpush1.msra.mxu0 0.0
    %71 = vmatprep.subr.mxu0 0.0
    %72 = vmatpush1.msra.mxu0 0.0
    %73 = vmatprep.subr.mxu0 0.0
    %74 = vmatpush1.msra.mxu0 0.0
    %75 = vmatprep.subr.mxu0 0.0
    %76 = vmatpush1.msra.mxu0 0.0
    %77 = vmatprep.subr.mxu0 0.0
    %78 = vmatpush1.msra.mxu0 0.0
    %79 = vmatprep.subr.mxu0 0.0
    %80 = vmatpush1.msra.mxu0 0.0
    %81 = vmatprep.subr.mxu0 0.0
    %82 = vmatpush1.msra.mxu0 0.0
    %83 = vmatprep.subr.mxu0 0.0
    %84 = vmatpush1.msra.mxu0 0.0
    %85 = vmatprep.subr.mxu0 0.0
    %86 = vmatpush1.msra.mxu0 0.0
    %87 = vmatprep.mubr.f32.mxu0 0.0
    %88 = vmatmul.mubr.f32.gmra.mrb[0].mxu0 %v21
    %v89 = vpop.f32.mrb[0].mxu0
    %v90 = vadd.f32 0.0, %v89
    %v91 = vpop.f32.mrb[0].mxu0
    %92 = vdwg.mxu0
    %vm93 = vcmask 261120
    %94 = vst.msk [vmem:[#allocation2] sm:$0xff] %vm93, %v90
    // Predicated region
    $region10: #{linear_ab.1} parent=1 // pred_check
      _
    $region11: #{linear_ab.1} parent=1 // pred_check_branch
      %96 = sbr.rel (0) target = $region13
    $region12: #{linear_ab.1} parent=1 // pred_region
      %s98 = ssub.s32 128, 128
      %99 = vsyncadd [#allocation3], %s98
      %s101 = sshll.u32 [#allocation2], 4
      %s102 = int_to_ptr.vmem [resolvable:$true] %s101
      %104 = dma.vmem_to_hbm [thread:$0]  %s102, 128, %s2, [#allocation3]
    $region13: #{linear_ab.1} parent=1 // pred_fallthru
      _
    // Predicated region
    $region14: #{linear_ab.1} parent=1 // pred_check
      _
    $region15: #{linear_ab.1} parent=1 // pred_check_branch
      %106 = sbr.rel (0) target = $region17
    $region16: #{linear_ab.1} parent=1 // pred_region
      %107 = dma.done [#allocation3], 128
    $region17: #{linear_ab.1} parent=1 // pred_fallthru
      _
    %108 = vsyncpa [#allocation3], 1

</llo_original>
